<compile_context>
chip_gen: v5e
topology: v5e:2x2
jax: 0.10.0
libtpu: 0.0.40
codegen_flags: <defaults>
</compile_context>

<pallas_src>
import jax
import jax.numpy as jnp
from jax.experimental import pallas as pl
from jax.experimental.pallas import tpu as pltpu


def _round_up(x, m):
    return ((x + m - 1) // m) * m


def _conv_actnorm_kernel(x_ref, w_ref, b_ref, s_ref, o_ref):
    # x_ref: (tH+2, W+2, Cin_p)   halo'd input tile (spatial zero-pad already applied)
    # w_ref: (9*Cin_p, tCout)     conv weights with the 3x3 taps folded into K
    # b_ref: (1, tCout)           actnorm bias
    # s_ref: (1, tCout)           actnorm scale = exp(logs)  (precomputed in wrapper)
    # o_ref: (tH, W, tCout)
    tH, W, _ = o_ref.shape

    # Three sublane-shifted views along W, reused across the three dh offsets
    # (3 sublane realignments instead of 9).
    xs = [x_ref[:, dw:dw + W, :] for dw in range(3)]             # each (tH+2, W, Cin_p)

    pieces = []
    for dh in range(3):
        for dw in range(3):
            pieces.append(xs[dw][dh:dh + tH])                    # (tH, W, Cin_p)
    patches = jnp.concatenate(pieces, axis=-1)                   # (tH, W, 9*Cin_p)

    # Single MXU-shaped matmul: M = tH*W, K = 9*Cin_p, N = tCout (operands in input
    # dtype, f32 accumulation).
    acc = jax.lax.dot_general(
        patches, w_ref[...],
        dimension_numbers=(((2,), (0,)), ((), ())),
        preferred_element_type=jnp.float32)                      # (tH, W, tCout) f32

    y = (acc + b_ref[0, :][None, None, :]) * s_ref[0, :][None, None, :]
    o_ref[...] = y.astype(o_ref.dtype)


def _pick_tiles(H, W, cin_p, cout_p, itemsize):
    # Cout tile: 256 when it divides (fills the 256x256 MXU on v6e/v7x), else 128 (v5e /
    # small-channel layers).  Per-generation knob if specialized further.
    tcout = 256 if cout_p % 256 == 0 else 128
    # H tile: largest divisor of H keeping the double-buffered working set under ~24 MiB;
    # cap at H//2 (when H >= 16) so batch=1-2 still yields enough parallel grid steps
    # for megacore sharding on v7x.
    budget = 24 * 1024 * 1024
    w_bytes = 9 * cin_p * tcout * itemsize * 2
    max_th = H if H < 16 else H // 2
    th = 1
    for cand in range(1, max_th + 1):
        if H % cand:
            continue
        in_b = (cand + 2) * (W + 2) * cin_p * itemsize * 2
        out_b = cand * W * tcout * itemsize * 2
        acc_b = cand * W * tcout * 4
        if in_b + out_b + acc_b + w_bytes <= budget:
            th = cand
    return th, tcout


def glow_conv2d(x_nchw, weight_oihw, an_bias, an_logs):
    """x_nchw: (B, Cin, H, W); weight_oihw: (Cout, Cin, 3, 3); an_bias/an_logs: (Cout,)."""
    B, Cin, H, W = x_nchw.shape
    Cout = weight_oihw.shape[0]
    dtype = x_nchw.dtype
    itemsize = jnp.dtype(dtype).itemsize

    # Pad channels to lane multiples: lane-dense stores + MXU-shaped K/N.
    cin_p = _round_up(Cin, 128)
    cout_p = _round_up(Cout, 128)
    th, tcout = _pick_tiles(H, W, cin_p, cout_p, itemsize)
    n_h = H // th
    n_co = cout_p // tcout

    # ---- wrapper-side layout prep ------------------------------------------------
    # NCHW -> NHWC, spatial same-pad (=1 for k=3, s=1), channel pad to cin_p.
    x_nhwc = jnp.transpose(x_nchw, (0, 2, 3, 1))
    x_pad = jnp.pad(x_nhwc, ((0, 0), (1, 1), (1, 1), (0, cin_p - Cin)))
    # Materialize halo'd H-tiles (2 duplicated rows each) so the overlapping windows are
    # expressible with plain Blocked BlockSpecs and pipelined automatically.
    row_idx = jnp.arange(n_h)[:, None] * th + jnp.arange(th + 2)[None, :]
    x_tiles = x_pad[:, row_idx]                                  # (B, n_h, th+2, W+2, cin_p)

    # Weights: OIHW -> HWIO, pad channels, fold the 3x3 taps into K (order matches the
    # in-kernel concat: tap index = dh*3 + dw, then cin).
    w_hwio = jnp.transpose(weight_oihw, (2, 3, 1, 0)).astype(dtype)
    w_p = jnp.pad(w_hwio, ((0, 0), (0, 0), (0, cin_p - Cin), (0, cout_p - Cout)))
    w_k = w_p.reshape(9 * cin_p, cout_p)

    bias_p = jnp.pad(an_bias.astype(jnp.float32), (0, cout_p - Cout)).reshape(1, cout_p)
    scale_p = jnp.pad(jnp.exp(an_logs).astype(jnp.float32), (0, cout_p - Cout),
                      constant_values=1.0).reshape(1, cout_p)

    out_nhwc = pl.pallas_call(
        _conv_actnorm_kernel,
        out_shape=jax.ShapeDtypeStruct((B, H, W, cout_p), dtype),
        grid_spec=pltpu.PrefetchScalarGridSpec(
            num_scalar_prefetch=0,
            grid=(B, n_h, n_co),
            in_specs=[
                pl.BlockSpec((pl.Squeezed(), pl.Squeezed(), th + 2, W + 2, cin_p),
                             lambda b, i, j: (b, i, 0, 0, 0)),
                pl.BlockSpec((9 * cin_p, tcout), lambda b, i, j: (0, j)),
                pl.BlockSpec((1, tcout), lambda b, i, j: (0, j)),
                pl.BlockSpec((1, tcout), lambda b, i, j: (0, j)),
            ],
            out_specs=pl.BlockSpec((pl.Squeezed(), th, W, tcout),
                                   lambda b, i, j: (b, i, 0, j)),
        ),
        compiler_params=pltpu.CompilerParams(
            dimension_semantics=("parallel", "parallel", "parallel"),
            vmem_limit_bytes=48 * 1024 * 1024),
    )(x_tiles, w_k, bias_p, scale_p)

    # Drop padded Cout lanes, back to NCHW.
    return jnp.transpose(out_nhwc[..., :Cout], (0, 3, 1, 2))


def _reference(x_nchw, weight_oihw, an_bias, an_logs):
    # Pure-JAX reference: lax conv (same padding) + per-channel affine.
    y = jax.lax.conv_general_dilated(
        x_nchw, weight_oihw, window_strides=(1, 1), padding=((1, 1), (1, 1)),
        dimension_numbers=('NCHW', 'OIHW', 'NCHW'))
    return (y + an_bias[None, :, None, None]) * jnp.exp(an_logs)[None, :, None, None]


if __name__ == "__main__":
    key = jax.random.PRNGKey(0)
    kx, kw, kb, kl = jax.random.split(key, 4)

    B, Cin, Cout, H, W = 2, 4, 8, 16, 16
    x = jax.random.normal(kx, (B, Cin, H, W), dtype=jnp.float32)
    # conv weight ~ N(0, 0.05) as in module __init__; conv has no bias (do_actnorm=True)
    weight = 0.05 * jax.random.normal(kw, (Cout, Cin, 3, 3), dtype=jnp.float32)
    # deterministic ActNorm parameters (zeros at __init__; small values to exercise math)
    an_bias = 0.1 * jax.random.normal(kb, (Cout,), dtype=jnp.float32)
    an_logs = 0.1 * jax.random.normal(kl, (Cout,), dtype=jnp.float32)

    out = glow_conv2d(x, weight, an_bias, an_logs)
    out = jax.block_until_ready(out)

    ref = _reference(x, weight, an_bias, an_logs)
    assert out.shape == (B, Cout, H, W)
    assert jnp.allclose(out, ref, atol=1e-4, rtol=1e-4), "mismatch vs reference conv+actnorm"

    print("KERNEL_OK")
</pallas_src>

<mosaic_0001>
module attributes {stable_mosaic.version = 11 : i64} {
  func.func @_conv_actnorm_kernel(%arg0: i32, %arg1: i32, %arg2: i32, %arg3: memref<1x1x10x18x128xf32, #tpu.memory_space<vmem>>, %arg4: memref<1152x128xf32, #tpu.memory_space<vmem>>, %arg5: memref<1x128xf32, #tpu.memory_space<vmem>>, %arg6: memref<1x128xf32, #tpu.memory_space<vmem>>, %arg7: memref<1x8x16x128xf32, #tpu.memory_space<vmem>>) attributes {dimension_semantics = [#tpu.dimension_semantics<parallel>, #tpu.dimension_semantics<parallel>, #tpu.dimension_semantics<parallel>], iteration_bounds = array<i64: 2, 2, 1>, scalar_prefetch = 0 : i64, scratch_operands = 0 : i64, tpu.core_type = #tpu.core_type<tc>, window_params = [{transform_indices = @transform_0, window_bounds = array<i64: 1, 1, 10, 18, 128>}, {transform_indices = @transform_1, window_bounds = array<i64: 1152, 128>}, {transform_indices = @transform_2, window_bounds = array<i64: 1, 128>}, {transform_indices = @transform_3, window_bounds = array<i64: 1, 128>}, {transform_indices = @transform_4, window_bounds = array<i64: 1, 8, 16, 128>}]} {
    %c0 = arith.constant 0 : index
    %c0_0 = arith.constant 0 : index
    %c0_1 = arith.constant 0 : index
    %c0_2 = arith.constant 0 : index
    %c0_3 = arith.constant 0 : index
    %0 = vector.load %arg3[%c0, %c0_0, %c0_1, %c0_2, %c0_3] : memref<1x1x10x18x128xf32, #tpu.memory_space<vmem>>, vector<1x1x10x16x128xf32>
    %1 = vector.shape_cast %0 : vector<1x1x10x16x128xf32> to vector<10x16x128xf32>
    %c0_4 = arith.constant 0 : index
    %c0_5 = arith.constant 0 : index
    %c0_6 = arith.constant 0 : index
    %c1 = arith.constant 1 : index
    %c0_7 = arith.constant 0 : index
    %2 = vector.load %arg3[%c0_4, %c0_5, %c0_6, %c1, %c0_7] : memref<1x1x10x18x128xf32, #tpu.memory_space<vmem>>, vector<1x1x10x16x128xf32>
    %3 = vector.shape_cast %2 : vector<1x1x10x16x128xf32> to vector<10x16x128xf32>
    %c0_8 = arith.constant 0 : index
    %c0_9 = arith.constant 0 : index
    %c0_10 = arith.constant 0 : index
    %c2 = arith.constant 2 : index
    %c0_11 = arith.constant 0 : index
    %4 = vector.load %arg3[%c0_8, %c0_9, %c0_10, %c2, %c0_11] : memref<1x1x10x18x128xf32, #tpu.memory_space<vmem>>, vector<1x1x10x16x128xf32>
    %5 = vector.shape_cast %4 : vector<1x1x10x16x128xf32> to vector<10x16x128xf32>
    %6 = vector.extract_strided_slice %1 {offsets = [0, 0, 0], sizes = [8, 16, 128], strides = [1, 1, 1]} : vector<10x16x128xf32> to vector<8x16x128xf32>
    %7 = vector.extract_strided_slice %3 {offsets = [0, 0, 0], sizes = [8, 16, 128], strides = [1, 1, 1]} : vector<10x16x128xf32> to vector<8x16x128xf32>
    %8 = vector.extract_strided_slice %5 {offsets = [0, 0, 0], sizes = [8, 16, 128], strides = [1, 1, 1]} : vector<10x16x128xf32> to vector<8x16x128xf32>
    %9 = vector.extract_strided_slice %1 {offsets = [1, 0, 0], sizes = [8, 16, 128], strides = [1, 1, 1]} : vector<10x16x128xf32> to vector<8x16x128xf32>
    %10 = vector.extract_strided_slice %3 {offsets = [1, 0, 0], sizes = [8, 16, 128], strides = [1, 1, 1]} : vector<10x16x128xf32> to vector<8x16x128xf32>
    %11 = vector.extract_strided_slice %5 {offsets = [1, 0, 0], sizes = [8, 16, 128], strides = [1, 1, 1]} : vector<10x16x128xf32> to vector<8x16x128xf32>
    %12 = vector.extract_strided_slice %1 {offsets = [2, 0, 0], sizes = [8, 16, 128], strides = [1, 1, 1]} : vector<10x16x128xf32> to vector<8x16x128xf32>
    %13 = vector.extract_strided_slice %3 {offsets = [2, 0, 0], sizes = [8, 16, 128], strides = [1, 1, 1]} : vector<10x16x128xf32> to vector<8x16x128xf32>
    %14 = vector.extract_strided_slice %5 {offsets = [2, 0, 0], sizes = [8, 16, 128], strides = [1, 1, 1]} : vector<10x16x128xf32> to vector<8x16x128xf32>
    %15 = tpu.concatenate %6, %7, %8, %9, %10, %11, %12, %13, %14 in 2 : vector<8x16x128xf32>, vector<8x16x128xf32>, vector<8x16x128xf32>, vector<8x16x128xf32>, vector<8x16x128xf32>, vector<8x16x128xf32>, vector<8x16x128xf32>, vector<8x16x128xf32>, vector<8x16x128xf32> -> vector<8x16x1152xf32>
    %c0_12 = arith.constant 0 : index
    %c0_13 = arith.constant 0 : index
    %16 = vector.load %arg4[%c0_12, %c0_13] : memref<1152x128xf32, #tpu.memory_space<vmem>>, vector<1152x128xf32>
    %cst = arith.constant dense<0.000000e+00> : vector<8x16x128xf32>
    %17 = tpu.matmul %15, %16, %cst {dimension_numbers = #tpu.dot_dimension_numbers<[2], [0], [0, 1], [1], [0, 0, 0, 1, 1, 1], [], []>} : vector<8x16x1152xf32>, vector<1152x128xf32>, vector<8x16x128xf32> -> vector<8x16x128xf32>
    %c0_14 = arith.constant 0 : index
    %c0_15 = arith.constant 0 : index
    %18 = vector.load %arg5[%c0_14, %c0_15] : memref<1x128xf32, #tpu.memory_space<vmem>>, vector<1x128xf32>
    %19 = vector.shape_cast %18 : vector<1x128xf32> to vector<128xf32>
    %20 = vector.shape_cast %19 : vector<128xf32> to vector<1x1x128xf32>
    %21 = vector.broadcast %20 : vector<1x1x128xf32> to vector<8x16x128xf32>
    %22 = arith.addf %17, %21 : vector<8x16x128xf32>
    %c0_16 = arith.constant 0 : index
    %c0_17 = arith.constant 0 : index
    %23 = vector.load %arg6[%c0_16, %c0_17] : memref<1x128xf32, #tpu.memory_space<vmem>>, vector<1x128xf32>
    %24 = vector.shape_cast %23 : vector<1x128xf32> to vector<128xf32>
    %25 = vector.shape_cast %24 : vector<128xf32> to vector<1x1x128xf32>
    %26 = vector.broadcast %25 : vector<1x1x128xf32> to vector<8x16x128xf32>
    %27 = arith.mulf %22, %26 : vector<8x16x128xf32>
    %c0_18 = arith.constant 0 : index
    %c0_19 = arith.constant 0 : index
    %c0_20 = arith.constant 0 : index
    %c0_21 = arith.constant 0 : index
    %28 = vector.load %arg7[%c0_18, %c0_19, %c0_20, %c0_21] : memref<1x8x16x128xf32, #tpu.memory_space<vmem>>, vector<1x8x16x128xf32>
    %29 = vector.shape_cast %28 : vector<1x8x16x128xf32> to vector<8x16x128xf32>
    %30 = vector.shape_cast %27 : vector<8x16x128xf32> to vector<1x8x16x128xf32>
    tpu.vector_store %arg7[%c0_18, %c0_19, %c0_20, %c0_21], %30 {strides = array<i32>} : memref<1x8x16x128xf32, #tpu.memory_space<vmem>>, vector<1x8x16x128xf32>,
    return
  }
  func.func @transform_0(%arg0: i32, %arg1: i32, %arg2: i32) -> (i32, i32, i32, i32, i32) {
    %c0_i32 = arith.constant 0 : i32
    %c0_i32_0 = arith.constant 0 : i32
    %c0_i32_1 = arith.constant 0 : i32
    %c0_i32_2 = arith.constant 0 : i32
    return %arg0, %arg1, %c0_i32, %c0_i32_0, %c0_i32_1 : i32, i32, i32, i32, i32
  }
  func.func @transform_1(%arg0: i32, %arg1: i32, %arg2: i32) -> (i32, i32) {
    %c0_i32 = arith.constant 0 : i32
    %c0_i32_0 = arith.constant 0 : i32
    return %c0_i32, %arg2 : i32, i32
  }
  func.func @transform_2(%arg0: i32, %arg1: i32, %arg2: i32) -> (i32, i32) {
    %c0_i32 = arith.constant 0 : i32
    %c0_i32_0 = arith.constant 0 : i32
    return %c0_i32, %arg2 : i32, i32
  }
  func.func @transform_3(%arg0: i32, %arg1: i32, %arg2: i32) -> (i32, i32) {
    %c0_i32 = arith.constant 0 : i32
    %c0_i32_0 = arith.constant 0 : i32
    return %c0_i32, %arg2 : i32, i32
  }
  func.func @transform_4(%arg0: i32, %arg1: i32, %arg2: i32) -> (i32, i32, i32, i32) {
    %c0_i32 = arith.constant 0 : i32
    %c0_i32_0 = arith.constant 0 : i32
    return %arg0, %arg1, %c0_i32, %arg2 : i32, i32, i32, i32
  }
}

</mosaic_0001>

<llo_original>
// kernel: tpu_custom_call.1
$region0: #{tpu_custom_call.1}
  #allocation0 [shape = 'u32[]', space=smem, size = 0x4, offset = 0x4, fixed_abs, tag = 'smem constant byte address 0x4 - core index']
  #allocation1 [shape = 'u32[72,128]{1,0:T(1,128)}', space=vmem, size = 0x9000, scoped, tag = 'internal scratch']
  %s0 = inlined_call_operand.vmem [shape: f32[2,2,10,18,128], index: 0, kind: input, shape index: {}]
  %s1 = inlined_call_operand.vmem [shape: f32[1152,128], index: 1, kind: input, shape index: {}]
  %s2 = inlined_call_operand.vmem [shape: f32[1,128], index: 2, kind: input, shape index: {}]
  %s3 = inlined_call_operand.vmem [shape: f32[1,128], index: 3, kind: input, shape index: {}]
  %s4 = inlined_call_operand.hbm [shape: f32[2,16,16,128], index: 4, kind: output, shape index: {}]
  %s5 = sld [smem:[#allocation0]]
  $region49: #{tpu_custom_call.1} parent=0
    _
  %s7 = ssub.s32 1, %s5
  %s8 = scalar_select 0, %s7, %s5
  $region1: #{tpu_custom_call.1} parent=0
    #allocation2 [shape = 'u8[131072]{0}', space=vmem, size = 0x20000, scoped, tag = 'output window, operand 0']
    #allocation3 [shape = 's32[2]{0}', space=sflag, size = 0x8, scoped, tag = 'scoped memory for tpu_custom_call.1']
    %9 = vsyncpa [#allocation3], 0
    %s10 = scalar_lea.sflag [#allocation3], 1
    %11 = vsyncpa %s10, 0
    loop: start=0, step=1, limit=6
    $region2: #{tpu_custom_call.1} parent=1 // loop_pre_header
      _
    $region3: #{tpu_custom_call.1} parent=1 // loop_header
      %s13 = sphi 0, %s17
      %p14 = scmp.ge.s32.totalorder %s13, 6
      %s20 = sphi 0, %s39
      %s21 = sphi 0, %s35
      %s22 = sphi 0, %s31
      %s23 = sphi 0, %s20
      %s24 = sphi 0, %s21
      %s25 = sphi 0, %s22
      %s26 = sphi 0, %s23
      %s27 = sphi 0, %s24
      %s28 = sphi 0, %s25
      %s44 = sphi 0, %s46
      %s47 = sphi 0, %s44
      %s48 = sphi 0, %s47
      %s64 = sphi 0, %s48
      %s70 = sphi 0, %s72
      %s73 = sphi 0, %s70
      %s74 = sphi 0, %s73
      %s90 = sphi 0, %s74
      %s96 = sphi 0, %s98
      %s99 = sphi 0, %s96
      %s100 = sphi 0, %s99
      %s116 = sphi 0, %s100
      %s122 = sphi 0, %s124
      %s125 = sphi 0, %s122
      %s126 = sphi 0, %s125
      %s142 = sphi 0, %s126
      %s152 = sphi 0, %s154
      %s155 = sphi 0, %s152
      %s156 = sphi 0, %s155
      %s172 = sphi 0, %s156
    $region4: #{tpu_custom_call.1} parent=1 // loop_header_branch
      %16 = sbr.rel (%p14) target = $region8
    $region5: #{tpu_custom_call.1} parent=1 // loop_body
      %s18 = ssub.s32 %s13, 1
      %s19 = ssub.s32 %s13, 2
      %s29 = sadd.s32 1, %s22
      %p30 = scmp.ge.s32.totalorder %s29, 1
      %s31 = scalar_select %p30, 0, %s29
      %s32 = sadd.s32 1, %s21
      %s33 = scalar_select %p30, %s32, %s21
      %p34 = scmp.ge.s32.totalorder %s33, 2
      %s35 = scalar_select %p34, 0, %s33
      %s36 = sadd.s32 1, %s20
      %s37 = scalar_select %p34, %s36, %s20
      %p38 = scmp.ge.s32.totalorder %s37, 2
      %s39 = scalar_select %p38, 0, %s37
      %s40 = ssub.s32 %s20, %s39
      %s41 = ssub.s32 %s21, %s35
      %s42 = sor.u32 %s40, %s41
      %p43 = scmp.eq.s32.totalorder %s42, 0
      %s45 = sadd.s32 %s44, 1
      %s46 = scalar_select %p43, %s44, %s45
      %p49 = pneg %p43
      %p50 = scmp.eq.s32.totalorder %s13, 3
      %p51 = por %p49, %p50
      %p52 = scmp.ne.s32.totalorder %s44, %s47
      %p53 = scmp.eq.s32.totalorder %s13, 0
      %p54 = por %p52, %p53
      %p55 = scmp.ne.s32.totalorder %s44, %s47
      %p56 = scmp.eq.s32.totalorder %s18, 3
      %p57 = por %p55, %p56
      %p58 = scmp.ne.s32.totalorder %s47, %s48
      %p59 = scmp.eq.s32.totalorder %s18, 0
      %p60 = por %p58, %p59
      %p61 = scmp.ne.s32.totalorder %s47, %s48
      %p62 = scmp.eq.s32.totalorder %s19, 3
      %p63 = por %p61, %p62
      %p65 = scmp.ne.s32.totalorder %s48, %s64
      %p66 = scmp.eq.s32.totalorder %s19, 0
      %p67 = por %p65, %p66
      %s68 = ssub.s32 %s22, %s31
      %p69 = scmp.eq.s32.totalorder %s68, 0
      %s71 = sadd.s32 %s70, 1
      %s72 = scalar_select %p69, %s70, %s71
      %p75 = pneg %p69
      %p76 = scmp.eq.s32.totalorder %s13, 3
      %p77 = por %p75, %p76
      %p78 = scmp.ne.s32.totalorder %s70, %s73
      %p79 = scmp.eq.s32.totalorder %s13, 0
      %p80 = por %p78, %p79
      %p81 = scmp.ne.s32.totalorder %s70, %s73
      %p82 = scmp.eq.s32.totalorder %s18, 3
      %p83 = por %p81, %p82
      %p84 = scmp.ne.s32.totalorder %s73, %s74
      %p85 = scmp.eq.s32.totalorder %s18, 0
      %p86 = por %p84, %p85
      %p87 = scmp.ne.s32.totalorder %s73, %s74
      %p88 = scmp.eq.s32.totalorder %s19, 3
      %p89 = por %p87, %p88
      %p91 = scmp.ne.s32.totalorder %s74, %s90
      %p92 = scmp.eq.s32.totalorder %s19, 0
      %p93 = por %p91, %p92
      %s94 = ssub.s32 %s22, %s31
      %p95 = scmp.eq.s32.totalorder %s94, 0
      %s97 = sadd.s32 %s96, 1
      %s98 = scalar_select %p95, %s96, %s97
      %p101 = pneg %p95
      %p102 = scmp.eq.s32.totalorder %s13, 3
      %p103 = por %p101, %p102
      %p104 = scmp.ne.s32.totalorder %s96, %s99
      %p105 = scmp.eq.s32.totalorder %s13, 0
      %p106 = por %p104, %p105
      %p107 = scmp.ne.s32.totalorder %s96, %s99
      %p108 = scmp.eq.s32.totalorder %s18, 3
      %p109 = por %p107, %p108
      %p110 = scmp.ne.s32.totalorder %s99, %s100
      %p111 = scmp.eq.s32.totalorder %s18, 0
      %p112 = por %p110, %p111
      %p113 = scmp.ne.s32.totalorder %s99, %s100
      %p114 = scmp.eq.s32.totalorder %s19, 3
      %p115 = por %p113, %p114
      %p117 = scmp.ne.s32.totalorder %s100, %s116
      %p118 = scmp.eq.s32.totalorder %s19, 0
      %p119 = por %p117, %p118
      %s120 = ssub.s32 %s22, %s31
      %p121 = scmp.eq.s32.totalorder %s120, 0
      %s123 = sadd.s32 %s122, 1
      %s124 = scalar_select %p121, %s122, %s123
      %p127 = pneg %p121
      %p128 = scmp.eq.s32.totalorder %s13, 3
      %p129 = por %p127, %p128
      %p130 = scmp.ne.s32.totalorder %s122, %s125
      %p131 = scmp.eq.s32.totalorder %s13, 0
      %p132 = por %p130, %p131
      %p133 = scmp.ne.s32.totalorder %s122, %s125
      %p134 = scmp.eq.s32.totalorder %s18, 3
      %p135 = por %p133, %p134
      %p136 = scmp.ne.s32.totalorder %s125, %s126
      %p137 = scmp.eq.s32.totalorder %s18, 0
      %p138 = por %p136, %p137
      %p139 = scmp.ne.s32.totalorder %s125, %s126
      %p140 = scmp.eq.s32.totalorder %s19, 3
      %p141 = por %p139, %p140
      %p143 = scmp.ne.s32.totalorder %s126, %s142
      %p144 = scmp.eq.s32.totalorder %s19, 0
      %p145 = por %p143, %p144
      %s146 = ssub.s32 %s20, %s39
      %s147 = ssub.s32 %s21, %s35
      %s148 = sor.u32 %s146, %s147
      %s149 = ssub.s32 %s22, %s31
      %s150 = sor.u32 %s148, %s149
      %p151 = scmp.eq.s32.totalorder %s150, 0
      %s153 = sadd.s32 %s152, 1
      %s154 = scalar_select %p151, %s152, %s153
      %p157 = pneg %p151
      %p158 = scmp.eq.s32.totalorder %s13, 3
      %p159 = por %p157, %p158
      %p160 = scmp.ne.s32.totalorder %s152, %s155
      %p161 = scmp.eq.s32.totalorder %s13, 0
      %p162 = por %p160, %p161
      %p163 = scmp.ne.s32.totalorder %s152, %s155
      %p164 = scmp.eq.s32.totalorder %s18, 3
      %p165 = por %p163, %p164
      %p166 = scmp.ne.s32.totalorder %s155, %s156
      %p167 = scmp.eq.s32.totalorder %s18, 0
      %p168 = por %p166, %p167
      %p169 = scmp.ne.s32.totalorder %s155, %s156
      %p170 = scmp.eq.s32.totalorder %s19, 3
      %p171 = por %p169, %p170
      %p173 = scmp.ne.s32.totalorder %s156, %s172
      %p174 = scmp.eq.s32.totalorder %s19, 0
      %p175 = por %p173, %p174
      %p176 = scmp.le.s32.totalorder 1, %s13
      %p177 = scmp.lt.s32.totalorder %s13, 5
      %p178 = pnand %p176, %p177
      %p179 = pneg %p178
      // Predicated region
      $region9: #{tpu_custom_call.1} parent=5 // pred_check
        _
      $region10: #{tpu_custom_call.1} parent=5 // pred_check_branch
        %181 = sbr.rel (%p178) target = $region12
      $region11: #{tpu_custom_call.1} parent=5 // pred_region
        %s182 = ssub.s32 %s13, 1
        // Predicated region
        $region13: #{tpu_custom_call.1} parent=11 // pred_check
          %p183 = pneg %p86
        $region14: #{tpu_custom_call.1} parent=11 // pred_check_branch
          %185 = sbr.rel (%p183) target = $region16
        $region15: #{tpu_custom_call.1} parent=11 // pred_region
          %p186 = scmp.lt.s32.totalorder %s25, 0
          %s187 = scalar_select %p186, %s25, 0
          %s188 = smul.addr %s187, 8
          %s189 = scalar_lea.vmem %s1, %s188
        $region16: #{tpu_custom_call.1} parent=11 // pred_fallthru
          _
        // Predicated region
        $region17: #{tpu_custom_call.1} parent=11 // pred_check
          %p190 = pneg %p112
        $region18: #{tpu_custom_call.1} parent=11 // pred_check_branch
          %192 = sbr.rel (%p190) target = $region20
        $region19: #{tpu_custom_call.1} parent=11 // pred_region
          %p193 = scmp.lt.s32.totalorder %s25, 0
          %s194 = scalar_select %p193, %s25, 0
          %s195 = scalar_lea.vmem %s2, %s194
        $region20: #{tpu_custom_call.1} parent=11 // pred_fallthru
          _
        // Predicated region
        $region21: #{tpu_custom_call.1} parent=11 // pred_check
          %p196 = pneg %p138
        $region22: #{tpu_custom_call.1} parent=11 // pred_check_branch
          %198 = sbr.rel (%p196) target = $region24
        $region23: #{tpu_custom_call.1} parent=11 // pred_region
          %p199 = scmp.lt.s32.totalorder %s25, 0
          %s200 = scalar_select %p199, %s25, 0
          %s201 = scalar_lea.vmem %s3, %s200
        $region24: #{tpu_custom_call.1} parent=11 // pred_fallthru
          _
      $region12: #{tpu_custom_call.1} parent=5 // pred_fallthru
        _
      %p202 = scmp.lt.s32.totalorder %s13, 4
      // Predicated region
      $region25: #{tpu_custom_call.1} parent=5 // pred_check
        %p203 = pneg %p202
      $region26: #{tpu_custom_call.1} parent=5 // pred_check_branch
        %205 = sbr.rel (%p203) target = $region28
      $region27: #{tpu_custom_call.1} parent=5 // pred_region
        // Predicated region
        $region29: #{tpu_custom_call.1} parent=27 // pred_check
          %p206 = pneg %p54
        $region30: #{tpu_custom_call.1} parent=27 // pred_check_branch
          %208 = sbr.rel (%p206) target = $region32
        $region31: #{tpu_custom_call.1} parent=27 // pred_region
          %p209 = scmp.lt.s32.totalorder %s20, 1
          %s210 = scalar_select %p209, %s20, 1
          %p211 = scmp.lt.s32.totalorder %s21, 1
          %s212 = scalar_select %p211, %s21, 1
          %s213 = smul.addr %s212, 30
          %s214 = smul.addr %s210, 60
          %s215 = sadd.s32 %s213, %s214
          %s216 = smul.addr %s215, 8
          %s217 = scalar_lea.vmem %s0, %s216
        $region32: #{tpu_custom_call.1} parent=27 // pred_fallthru
          _
      $region28: #{tpu_custom_call.1} parent=5 // pred_fallthru
        _
      %p218 = scmp.le.s32.totalorder 1, %s13
      %p219 = scmp.lt.s32.totalorder %s13, 5
      %p220 = pnand %p218, %p219
      %p221 = pneg %p220
      // Predicated region
      $region33: #{tpu_custom_call.1} parent=5 // pred_check
        _
      $region34: #{tpu_custom_call.1} parent=5 // pred_check_branch
        %223 = sbr.rel (%p220) target = $region36
      $region35: #{tpu_custom_call.1} parent=5 // pred_region
        %s224 = ssub.s32 %s13, 1
        %p225 = scmp.lt.s32.totalorder %s23, 1
        %s226 = scalar_select %p225, %s23, 1
        %p227 = scmp.lt.s32.totalorder %s24, 1
        %s228 = scalar_select %p227, %s24, 1
        %s229 = smul.addr %s228, 30
        %s230 = smul.addr %s226, 60
        %s231 = sadd.s32 %s229, %s230
        %s232 = smul.addr %s231, 8
        %s233 = scalar_lea.vmem %s0, %s232
        %p234 = pneg %p60
        %p235 = pneg %p57
        %p236 = scmp.lt.s32.totalorder %s25, 0
        %s237 = scalar_select %p236, %s25, 0
        %s238 = smul.addr %s237, 8
        %s239 = scalar_lea.vmem %s1, %s238
        %p240 = pneg %p86
        %p241 = pneg %p83
        %p242 = scmp.lt.s32.totalorder %s25, 0
        %s243 = scalar_select %p242, %s25, 0
        %s244 = scalar_lea.vmem %s2, %s243
        %p245 = pneg %p112
        %p246 = pneg %p109
        %p247 = scmp.lt.s32.totalorder %s25, 0
        %s248 = scalar_select %p247, %s25, 0
        %s249 = scalar_lea.vmem %s3, %s248
        %p250 = pneg %p138
        %p251 = pneg %p135
        %p252 = pneg %p168
        %p253 = pneg %p165
        %s254 = sand.u32 %s155, 1
        %s255 = scalar_lea.sflag [#allocation3], %s254
        %s256 = sand.u32 %s155, 1
        %s257 = smul.addr %s256, 128
        %s258 = scalar_lea.vmem [#allocation2], %s257
        %p259 = scmp.lt.s32.totalorder %s23, 1
        %s260 = scalar_select %p259, %s23, 1
        %p261 = scmp.lt.s32.totalorder %s24, 1
        %s262 = scalar_select %p261, %s24, 1
        %s263 = smul.addr %s262, 30
        %s264 = smul.addr %s260, 60
        %s265 = sadd.s32 %s263, %s264
        %s266 = smul.addr %s265, 8
        %s267 = scalar_lea.vmem %s0, %s266
        %p268 = scmp.lt.s32.totalorder %s25, 0
        %s269 = scalar_select %p268, %s25, 0
        %s270 = smul.addr %s269, 8
        %s271 = scalar_lea.vmem %s1, %s270
        %p272 = scmp.lt.s32.totalorder %s25, 0
        %s273 = scalar_select %p272, %s25, 0
        %s274 = scalar_lea.vmem %s2, %s273
        %p275 = scmp.lt.s32.totalorder %s25, 0
        %s276 = scalar_select %p275, %s25, 0
        %s277 = scalar_lea.vmem %s3, %s276
        %s278 = smul.u32 8, %s24
        %v279 = vld [vmem:[%s267] sm:$0xff]
        %v280 = vld [vmem:[%s267 + $0x8] sm:$0xff]
        %v281 = vld [vmem:[%s267 + $0x18] sm:$0xff]
        %v282 = vld [vmem:[%s267 + $0x20] sm:$0xff]
        %v283 = vld [vmem:[%s267 + $0x30] sm:$0xff]
        %v284 = vld [vmem:[%s267 + $0x38] sm:$0xff]
        %v285 = vld [vmem:[%s267 + $0x48] sm:$0xff]
        %v286 = vld [vmem:[%s267 + $0x50] sm:$0xff]
        %v287 = vld [vmem:[%s267 + $0x60] sm:$0xff]
        %v288 = vld [vmem:[%s267 + $0x68] sm:$0xff]
        %v289 = vld [vmem:[%s267 + $0x78] sm:$0xff]
        %v290 = vld [vmem:[%s267 + $0x80] sm:$0xff]
        %v291 = vld [vmem:[%s267 + $0x90] sm:$0xff]
        %v292 = vld [vmem:[%s267 + $0x98] sm:$0xff]
        %v293 = vld [vmem:[%s267 + $0xa8] sm:$0xff]
        %v294 = vld [vmem:[%s267 + $0xb0] sm:$0xff]
        %v295 = vld [vmem:[%s267 + $0xc0] sm:$0xff]
        %v296 = vld [vmem:[%s267 + $0xc8] sm:$0xff]
        %v297 = vld [vmem:[%s267 + $0xd8] sm:$0xff]
        %v298 = vld [vmem:[%s267 + $0xe0] sm:$0xff]
        %v299 = vld [vmem:[%s267 + $0x1] sm:$0xff]
        %v300 = vld [vmem:[%s267 + $0x9] sm:$0xff]
        %v301 = vld [vmem:[%s267 + $0x19] sm:$0xff]
        %v302 = vld [vmem:[%s267 + $0x21] sm:$0xff]
        %v303 = vld [vmem:[%s267 + $0x31] sm:$0xff]
        %v304 = vld [vmem:[%s267 + $0x39] sm:$0xff]
        %v305 = vld [vmem:[%s267 + $0x49] sm:$0xff]
        %v306 = vld [vmem:[%s267 + $0x51] sm:$0xff]
        %v307 = vld [vmem:[%s267 + $0x61] sm:$0xff]
        %v308 = vld [vmem:[%s267 + $0x69] sm:$0xff]
        %v309 = vld [vmem:[%s267 + $0x79] sm:$0xff]
        %v310 = vld [vmem:[%s267 + $0x81] sm:$0xff]
        %v311 = vld [vmem:[%s267 + $0x91] sm:$0xff]
        %v312 = vld [vmem:[%s267 + $0x99] sm:$0xff]
        %v313 = vld [vmem:[%s267 + $0xa9] sm:$0xff]
        %v314 = vld [vmem:[%s267 + $0xb1] sm:$0xff]
        %v315 = vld [vmem:[%s267 + $0xc1] sm:$0xff]
        %v316 = vld [vmem:[%s267 + $0xc9] sm:$0xff]
        %v317 = vld [vmem:[%s267 + $0xd9] sm:$0xff]
        %v318 = vld [vmem:[%s267 + $0xe1] sm:$0xff]
        %v319 = vld [vmem:[%s267 + $0x2] sm:$0xff]
        %v320 = vld [vmem:[%s267 + $0xa] sm:$0xff]
        %v321 = vld [vmem:[%s267 + $0x1a] sm:$0xff]
        %v322 = vld [vmem:[%s267 + $0x22] sm:$0xff]
        %v323 = vld [vmem:[%s267 + $0x32] sm:$0xff]
        %v324 = vld [vmem:[%s267 + $0x3a] sm:$0xff]
        %v325 = vld [vmem:[%s267 + $0x4a] sm:$0xff]
        %v326 = vld [vmem:[%s267 + $0x52] sm:$0xff]
        %v327 = vld [vmem:[%s267 + $0x62] sm:$0xff]
        %v328 = vld [vmem:[%s267 + $0x6a] sm:$0xff]
        %v329 = vld [vmem:[%s267 + $0x7a] sm:$0xff]
        %v330 = vld [vmem:[%s267 + $0x82] sm:$0xff]
        %v331 = vld [vmem:[%s267 + $0x92] sm:$0xff]
        %v332 = vld [vmem:[%s267 + $0x9a] sm:$0xff]
        %v333 = vld [vmem:[%s267 + $0xaa] sm:$0xff]
        %v334 = vld [vmem:[%s267 + $0xb2] sm:$0xff]
        %v335 = vld [vmem:[%s267 + $0xc2] sm:$0xff]
        %v336 = vld [vmem:[%s267 + $0xca] sm:$0xff]
        %v337 = vld [vmem:[%s267 + $0xda] sm:$0xff]
        %v338 = vld [vmem:[%s267 + $0xe2] sm:$0xff]
        %v339 = vld [vmem:[%s271] sm:$0xff]
        %v340 = vld [vmem:[%s271 + $0x8] sm:$0xff]
        %v341 = vld [vmem:[%s271 + $0x10] sm:$0xff]
        %v342 = vld [vmem:[%s271 + $0x18] sm:$0xff]
        %v343 = vld [vmem:[%s271 + $0x20] sm:$0xff]
        %v344 = vld [vmem:[%s271 + $0x28] sm:$0xff]
        %v345 = vld [vmem:[%s271 + $0x30] sm:$0xff]
        %v346 = vld [vmem:[%s271 + $0x38] sm:$0xff]
        %v347 = vld [vmem:[%s271 + $0x40] sm:$0xff]
        %v348 = vld [vmem:[%s271 + $0x48] sm:$0xff]
        %v349 = vld [vmem:[%s271 + $0x50] sm:$0xff]
        %v350 = vld [vmem:[%s271 + $0x58] sm:$0xff]
        %v351 = vld [vmem:[%s271 + $0x60] sm:$0xff]
        %v352 = vld [vmem:[%s271 + $0x68] sm:$0xff]
        %v353 = vld [vmem:[%s271 + $0x70] sm:$0xff]
        %v354 = vld [vmem:[%s271 + $0x78] sm:$0xff]
        %v355 = vld [vmem:[%s271 + $0x80] sm:$0xff]
        %v356 = vld [vmem:[%s271 + $0x88] sm:$0xff]
        %v357 = vld [vmem:[%s271 + $0x90] sm:$0xff]
        %v358 = vld [vmem:[%s271 + $0x98] sm:$0xff]
        %v359 = vld [vmem:[%s271 + $0xa0] sm:$0xff]
        %v360 = vld [vmem:[%s271 + $0xa8] sm:$0xff]
        %v361 = vld [vmem:[%s271 + $0xb0] sm:$0xff]
        %v362 = vld [vmem:[%s271 + $0xb8] sm:$0xff]
        %v363 = vld [vmem:[%s271 + $0xc0] sm:$0xff]
        %v364 = vld [vmem:[%s271 + $0xc8] sm:$0xff]
        %v365 = vld [vmem:[%s271 + $0xd0] sm:$0xff]
        %v366 = vld [vmem:[%s271 + $0xd8] sm:$0xff]
        %v367 = vld [vmem:[%s271 + $0xe0] sm:$0xff]
        %v368 = vld [vmem:[%s271 + $0xe8] sm:$0xff]
        %v369 = vld [vmem:[%s271 + $0xf0] sm:$0xff]
        %v370 = vld [vmem:[%s271 + $0xf8] sm:$0xff]
        %v371 = vld [vmem:[%s271 + $0x100] sm:$0xff]
        %v372 = vld [vmem:[%s271 + $0x108] sm:$0xff]
        %v373 = vld [vmem:[%s271 + $0x110] sm:$0xff]
        %v374 = vld [vmem:[%s271 + $0x118] sm:$0xff]
        %v375 = vld [vmem:[%s271 + $0x120] sm:$0xff]
        %v376 = vld [vmem:[%s271 + $0x128] sm:$0xff]
        %v377 = vld [vmem:[%s271 + $0x130] sm:$0xff]
        %v378 = vld [vmem:[%s271 + $0x138] sm:$0xff]
        %v379 = vld [vmem:[%s271 + $0x140] sm:$0xff]
        %v380 = vld [vmem:[%s271 + $0x148] sm:$0xff]
        %v381 = vld [vmem:[%s271 + $0x150] sm:$0xff]
        %v382 = vld [vmem:[%s271 + $0x158] sm:$0xff]
        %v383 = vld [vmem:[%s271 + $0x160] sm:$0xff]
        %v384 = vld [vmem:[%s271 + $0x168] sm:$0xff]
        %v385 = vld [vmem:[%s271 + $0x170] sm:$0xff]
        %v386 = vld [vmem:[%s271 + $0x178] sm:$0xff]
        %v387 = vld [vmem:[%s271 + $0x180] sm:$0xff]
        %v388 = vld [vmem:[%s271 + $0x188] sm:$0xff]
        %v389 = vld [vmem:[%s271 + $0x190] sm:$0xff]
        %v390 = vld [vmem:[%s271 + $0x198] sm:$0xff]
        %v391 = vld [vmem:[%s271 + $0x1a0] sm:$0xff]
        %v392 = vld [vmem:[%s271 + $0x1a8] sm:$0xff]
        %v393 = vld [vmem:[%s271 + $0x1b0] sm:$0xff]
        %v394 = vld [vmem:[%s271 + $0x1b8] sm:$0xff]
        %v395 = vld [vmem:[%s271 + $0x1c0] sm:$0xff]
        %v396 = vld [vmem:[%s271 + $0x1c8] sm:$0xff]
        %v397 = vld [vmem:[%s271 + $0x1d0] sm:$0xff]
        %v398 = vld [vmem:[%s271 + $0x1d8] sm:$0xff]
        %v399 = vld [vmem:[%s271 + $0x1e0] sm:$0xff]
        %v400 = vld [vmem:[%s271 + $0x1e8] sm:$0xff]
        %v401 = vld [vmem:[%s271 + $0x1f0] sm:$0xff]
        %v402 = vld [vmem:[%s271 + $0x1f8] sm:$0xff]
        %v403 = vld [vmem:[%s271 + $0x200] sm:$0xff]
        %v404 = vld [vmem:[%s271 + $0x208] sm:$0xff]
        %v405 = vld [vmem:[%s271 + $0x210] sm:$0xff]
        %v406 = vld [vmem:[%s271 + $0x218] sm:$0xff]
        %v407 = vld [vmem:[%s271 + $0x220] sm:$0xff]
        %v408 = vld [vmem:[%s271 + $0x228] sm:$0xff]
        %v409 = vld [vmem:[%s271 + $0x230] sm:$0xff]
        %v410 = vld [vmem:[%s271 + $0x238] sm:$0xff]
        %v411 = vld [vmem:[%s271 + $0x240] sm:$0xff]
        %v412 = vld [vmem:[%s271 + $0x248] sm:$0xff]
        %v413 = vld [vmem:[%s271 + $0x250] sm:$0xff]
        %v414 = vld [vmem:[%s271 + $0x258] sm:$0xff]
        %v415 = vld [vmem:[%s271 + $0x260] sm:$0xff]
        %v416 = vld [vmem:[%s271 + $0x268] sm:$0xff]
        %v417 = vld [vmem:[%s271 + $0x270] sm:$0xff]
        %v418 = vld [vmem:[%s271 + $0x278] sm:$0xff]
        %v419 = vld [vmem:[%s271 + $0x280] sm:$0xff]
        %v420 = vld [vmem:[%s271 + $0x288] sm:$0xff]
        %v421 = vld [vmem:[%s271 + $0x290] sm:$0xff]
        %v422 = vld [vmem:[%s271 + $0x298] sm:$0xff]
        %v423 = vld [vmem:[%s271 + $0x2a0] sm:$0xff]
        %v424 = vld [vmem:[%s271 + $0x2a8] sm:$0xff]
        %v425 = vld [vmem:[%s271 + $0x2b0] sm:$0xff]
        %v426 = vld [vmem:[%s271 + $0x2b8] sm:$0xff]
        %v427 = vld [vmem:[%s271 + $0x2c0] sm:$0xff]
        %v428 = vld [vmem:[%s271 + $0x2c8] sm:$0xff]
        %v429 = vld [vmem:[%s271 + $0x2d0] sm:$0xff]
        %v430 = vld [vmem:[%s271 + $0x2d8] sm:$0xff]
        %v431 = vld [vmem:[%s271 + $0x2e0] sm:$0xff]
        %v432 = vld [vmem:[%s271 + $0x2e8] sm:$0xff]
        %v433 = vld [vmem:[%s271 + $0x2f0] sm:$0xff]
        %v434 = vld [vmem:[%s271 + $0x2f8] sm:$0xff]
        %v435 = vld [vmem:[%s271 + $0x300] sm:$0xff]
        %v436 = vld [vmem:[%s271 + $0x308] sm:$0xff]
        %v437 = vld [vmem:[%s271 + $0x310] sm:$0xff]
        %v438 = vld [vmem:[%s271 + $0x318] sm:$0xff]
        %v439 = vld [vmem:[%s271 + $0x320] sm:$0xff]
        %v440 = vld [vmem:[%s271 + $0x328] sm:$0xff]
        %v441 = vld [vmem:[%s271 + $0x330] sm:$0xff]
        %v442 = vld [vmem:[%s271 + $0x338] sm:$0xff]
        %v443 = vld [vmem:[%s271 + $0x340] sm:$0xff]
        %v444 = vld [vmem:[%s271 + $0x348] sm:$0xff]
        %v445 = vld [vmem:[%s271 + $0x350] sm:$0xff]
        %v446 = vld [vmem:[%s271 + $0x358] sm:$0xff]
        %v447 = vld [vmem:[%s271 + $0x360] sm:$0xff]
        %v448 = vld [vmem:[%s271 + $0x368] sm:$0xff]
        %v449 = vld [vmem:[%s271 + $0x370] sm:$0xff]
        %v450 = vld [vmem:[%s271 + $0x378] sm:$0xff]
        %v451 = vld [vmem:[%s271 + $0x380] sm:$0xff]
        %v452 = vld [vmem:[%s271 + $0x388] sm:$0xff]
        %v453 = vld [vmem:[%s271 + $0x390] sm:$0xff]
        %v454 = vld [vmem:[%s271 + $0x398] sm:$0xff]
        %v455 = vld [vmem:[%s271 + $0x3a0] sm:$0xff]
        %v456 = vld [vmem:[%s271 + $0x3a8] sm:$0xff]
        %v457 = vld [vmem:[%s271 + $0x3b0] sm:$0xff]
        %v458 = vld [vmem:[%s271 + $0x3b8] sm:$0xff]
        %v459 = vld [vmem:[%s271 + $0x3c0] sm:$0xff]
        %v460 = vld [vmem:[%s271 + $0x3c8] sm:$0xff]
        %v461 = vld [vmem:[%s271 + $0x3d0] sm:$0xff]
        %v462 = vld [vmem:[%s271 + $0x3d8] sm:$0xff]
        %v463 = vld [vmem:[%s271 + $0x3e0] sm:$0xff]
        %v464 = vld [vmem:[%s271 + $0x3e8] sm:$0xff]
        %v465 = vld [vmem:[%s271 + $0x3f0] sm:$0xff]
        %v466 = vld [vmem:[%s271 + $0x3f8] sm:$0xff]
        %v467 = vld [vmem:[%s271 + $0x400] sm:$0xff]
        %v468 = vld [vmem:[%s271 + $0x408] sm:$0xff]
        %v469 = vld [vmem:[%s271 + $0x410] sm:$0xff]
        %v470 = vld [vmem:[%s271 + $0x418] sm:$0xff]
        %v471 = vld [vmem:[%s271 + $0x420] sm:$0xff]
        %v472 = vld [vmem:[%s271 + $0x428] sm:$0xff]
        %v473 = vld [vmem:[%s271 + $0x430] sm:$0xff]
        %v474 = vld [vmem:[%s271 + $0x438] sm:$0xff]
        %v475 = vld [vmem:[%s271 + $0x440] sm:$0xff]
        %v476 = vld [vmem:[%s271 + $0x448] sm:$0xff]
        %v477 = vld [vmem:[%s271 + $0x450] sm:$0xff]
        %v478 = vld [vmem:[%s271 + $0x458] sm:$0xff]
        %v479 = vld [vmem:[%s271 + $0x460] sm:$0xff]
        %v480 = vld [vmem:[%s271 + $0x468] sm:$0xff]
        %v481 = vld [vmem:[%s271 + $0x470] sm:$0xff]
        %v482 = vld [vmem:[%s271 + $0x478] sm:$0xff]
        %v483 = vld [vmem:[%s274] sm:$0x1]
        %v485 = vperm.slane %v483, 0
        %487 = vmatpush.msra.mxu0 %v354
        %488 = vmatpush.msra.mxu0 %v353
        %489 = vmatpush.msra.mxu0 %v352
        %490 = vmatpush.msra.mxu0 %v351
        %491 = vmatpush.msra.mxu0 %v350
        %492 = vmatpush.msra.mxu0 %v349
        %493 = vmatpush.msra.mxu0 %v348
        %494 = vmatpush.msra.mxu0 %v347
        %495 = vmatpush.msra.mxu0 %v346
        %496 = vmatpush.msra.mxu0 %v345
        %497 = vmatpush.msra.mxu0 %v344
        %498 = vmatpush.msra.mxu0 %v343
        %499 = vmatpush.msra.mxu0 %v342
        %500 = vmatpush.msra.mxu0 %v341
        %501 = vmatpush.msra.mxu0 %v340
        %502 = vmatpush.msra.mxu0 %v339
        %503 = vmatmul.f32.gmra.mxu0 %v279
        %v504 = vpop.f32.mrf.mxu0
        %v505 = vadd.f32 %v485, %v504
        %506 = vmatmul.f32.gmra.mxu0 %v280
        %v507 = vpop.f32.mrf.mxu0
        %v508 = vadd.f32 %v485, %v507
        %509 = vmatmul.f32.gmra.mxu0 %v281
        %v510 = vpop.f32.mrf.mxu0
        %v511 = vadd.f32 %v485, %v510
        %512 = vmatmul.f32.gmra.mxu0 %v282
        %v513 = vpop.f32.mrf.mxu0
        %v514 = vadd.f32 %v485, %v513
        %515 = vmatmul.f32.gmra.mxu0 %v283
        %v516 = vpop.f32.mrf.mxu0
        %v517 = vadd.f32 %v485, %v516
        %518 = vmatmul.f32.gmra.mxu0 %v284
        %v519 = vpop.f32.mrf.mxu0
        %v520 = vadd.f32 %v485, %v519
        %521 = vmatmul.f32.gmra.mxu0 %v285
        %v522 = vpop.f32.mrf.mxu0
        %v523 = vadd.f32 %v485, %v522
        %524 = vmatmul.f32.gmra.mxu0 %v286
        %v525 = vpop.f32.mrf.mxu0
        %v526 = vadd.f32 %v485, %v525
        %527 = vmatmul.f32.gmra.mxu0 %v287
        %v528 = vpop.f32.mrf.mxu0
        %v529 = vadd.f32 %v485, %v528
        %530 = vmatmul.f32.gmra.mxu0 %v288
        %v531 = vpop.f32.mrf.mxu0
        %v532 = vadd.f32 %v485, %v531
        %533 = vmatmul.f32.gmra.mxu0 %v289
        %v534 = vpop.f32.mrf.mxu0
        %v535 = vadd.f32 %v485, %v534
        %536 = vmatmul.f32.gmra.mxu0 %v290
        %v537 = vpop.f32.mrf.mxu0
        %v538 = vadd.f32 %v485, %v537
        %539 = vmatmul.f32.gmra.mxu0 %v291
        %v540 = vpop.f32.mrf.mxu0
        %v541 = vadd.f32 %v485, %v540
        %542 = vmatmul.f32.gmra.mxu0 %v292
        %v543 = vpop.f32.mrf.mxu0
        %v544 = vadd.f32 %v485, %v543
        %545 = vmatmul.f32.gmra.mxu0 %v293
        %v546 = vpop.f32.mrf.mxu0
        %v547 = vadd.f32 %v485, %v546
        %548 = vmatmul.f32.gmra.mxu0 %v294
        %v549 = vpop.f32.mrf.mxu0
        %v550 = vadd.f32 %v485, %v549
        %551 = vdwg.mxu0
        %552 = vmatpush.msra.mxu0 %v370
        %553 = vmatpush.msra.mxu0 %v369
        %554 = vmatpush.msra.mxu0 %v368
        %555 = vmatpush.msra.mxu0 %v367
        %556 = vmatpush.msra.mxu0 %v366
        %557 = vmatpush.msra.mxu0 %v365
        %558 = vmatpush.msra.mxu0 %v364
        %559 = vmatpush.msra.mxu0 %v363
        %560 = vmatpush.msra.mxu0 %v362
        %561 = vmatpush.msra.mxu0 %v361
        %562 = vmatpush.msra.mxu0 %v360
        %563 = vmatpush.msra.mxu0 %v359
        %564 = vmatpush.msra.mxu0 %v358
        %565 = vmatpush.msra.mxu0 %v357
        %566 = vmatpush.msra.mxu0 %v356
        %567 = vmatpush.msra.mxu0 %v355
        %568 = vmatmul.f32.gmra.mxu0 %v299
        %v569 = vpop.f32.mrf.mxu0
        %v570 = vadd.f32 %v505, %v569
        %571 = vmatmul.f32.gmra.mxu0 %v300
        %v572 = vpop.f32.mrf.mxu0
        %v573 = vadd.f32 %v508, %v572
        %574 = vmatmul.f32.gmra.mxu0 %v301
        %v575 = vpop.f32.mrf.mxu0
        %v576 = vadd.f32 %v511, %v575
        %577 = vmatmul.f32.gmra.mxu0 %v302
        %v578 = vpop.f32.mrf.mxu0
        %v579 = vadd.f32 %v514, %v578
        %580 = vmatmul.f32.gmra.mxu0 %v303
        %v581 = vpop.f32.mrf.mxu0
        %v582 = vadd.f32 %v517, %v581
        %583 = vmatmul.f32.gmra.mxu0 %v304
        %v584 = vpop.f32.mrf.mxu0
        %v585 = vadd.f32 %v520, %v584
        %586 = vmatmul.f32.gmra.mxu0 %v305
        %v587 = vpop.f32.mrf.mxu0
        %v588 = vadd.f32 %v523, %v587
        %589 = vmatmul.f32.gmra.mxu0 %v306
        %v590 = vpop.f32.mrf.mxu0
        %v591 = vadd.f32 %v526, %v590
        %592 = vmatmul.f32.gmra.mxu0 %v307
        %v593 = vpop.f32.mrf.mxu0
        %v594 = vadd.f32 %v529, %v593
        %595 = vmatmul.f32.gmra.mxu0 %v308
        %v596 = vpop.f32.mrf.mxu0
        %v597 = vadd.f32 %v532, %v596
        %598 = vmatmul.f32.gmra.mxu0 %v309
        %v599 = vpop.f32.mrf.mxu0
        %v600 = vadd.f32 %v535, %v599
        %601 = vmatmul.f32.gmra.mxu0 %v310
        %v602 = vpop.f32.mrf.mxu0
        %v603 = vadd.f32 %v538, %v602
        %604 = vmatmul.f32.gmra.mxu0 %v311
        %v605 = vpop.f32.mrf.mxu0
        %v606 = vadd.f32 %v541, %v605
        %607 = vmatmul.f32.gmra.mxu0 %v312
        %v608 = vpop.f32.mrf.mxu0
        %v609 = vadd.f32 %v544, %v608
        %610 = vmatmul.f32.gmra.mxu0 %v313
        %v611 = vpop.f32.mrf.mxu0
        %v612 = vadd.f32 %v547, %v611
        %613 = vmatmul.f32.gmra.mxu0 %v314
        %v614 = vpop.f32.mrf.mxu0
        %v615 = vadd.f32 %v550, %v614
        %616 = vdwg.mxu0
        %617 = vmatpush.msra.mxu0 %v386
        %618 = vmatpush.msra.mxu0 %v385
        %619 = vmatpush.msra.mxu0 %v384
        %620 = vmatpush.msra.mxu0 %v383
        %621 = vmatpush.msra.mxu0 %v382
        %622 = vmatpush.msra.mxu0 %v381
        %623 = vmatpush.msra.mxu0 %v380
        %624 = vmatpush.msra.mxu0 %v379
        %625 = vmatpush.msra.mxu0 %v378
        %626 = vmatpush.msra.mxu0 %v377
        %627 = vmatpush.msra.mxu0 %v376
        %628 = vmatpush.msra.mxu0 %v375
        %629 = vmatpush.msra.mxu0 %v374
        %630 = vmatpush.msra.mxu0 %v373
        %631 = vmatpush.msra.mxu0 %v372
        %632 = vmatpush.msra.mxu0 %v371
        %633 = vmatmul.f32.gmra.mxu0 %v319
        %v634 = vpop.f32.mrf.mxu0
        %v635 = vadd.f32 %v570, %v634
        %636 = vmatmul.f32.gmra.mxu0 %v320
        %v637 = vpop.f32.mrf.mxu0
        %v638 = vadd.f32 %v573, %v637
        %639 = vmatmul.f32.gmra.mxu0 %v321
        %v640 = vpop.f32.mrf.mxu0
        %v641 = vadd.f32 %v576, %v640
        %642 = vmatmul.f32.gmra.mxu0 %v322
        %v643 = vpop.f32.mrf.mxu0
        %v644 = vadd.f32 %v579, %v643
        %645 = vmatmul.f32.gmra.mxu0 %v323
        %v646 = vpop.f32.mrf.mxu0
        %v647 = vadd.f32 %v582, %v646
        %648 = vmatmul.f32.gmra.mxu0 %v324
        %v649 = vpop.f32.mrf.mxu0
        %v650 = vadd.f32 %v585, %v649
        %651 = vmatmul.f32.gmra.mxu0 %v325
        %v652 = vpop.f32.mrf.mxu0
        %v653 = vadd.f32 %v588, %v652
        %654 = vmatmul.f32.gmra.mxu0 %v326
        %v655 = vpop.f32.mrf.mxu0
        %v656 = vadd.f32 %v591, %v655
        %657 = vmatmul.f32.gmra.mxu0 %v327
        %v658 = vpop.f32.mrf.mxu0
        %v659 = vadd.f32 %v594, %v658
        %660 = vmatmul.f32.gmra.mxu0 %v328
        %v661 = vpop.f32.mrf.mxu0
        %v662 = vadd.f32 %v597, %v661
        %663 = vmatmul.f32.gmra.mxu0 %v329
        %v664 = vpop.f32.mrf.mxu0
        %v665 = vadd.f32 %v600, %v664
        %666 = vmatmul.f32.gmra.mxu0 %v330
        %v667 = vpop.f32.mrf.mxu0
        %v668 = vadd.f32 %v603, %v667
        %669 = vmatmul.f32.gmra.mxu0 %v331
        %v670 = vpop.f32.mrf.mxu0
        %v671 = vadd.f32 %v606, %v670
        %672 = vmatmul.f32.gmra.mxu0 %v332
        %v673 = vpop.f32.mrf.mxu0
        %v674 = vadd.f32 %v609, %v673
        %675 = vmatmul.f32.gmra.mxu0 %v333
        %v676 = vpop.f32.mrf.mxu0
        %v677 = vadd.f32 %v612, %v676
        %678 = vmatmul.f32.gmra.mxu0 %v334
        %v679 = vpop.f32.mrf.mxu0
        %v680 = vadd.f32 %v615, %v679
        %681 = vdwg.mxu0
        %682 = vmatpush.msra.mxu0 %v402
        %683 = vmatpush.msra.mxu0 %v401
        %684 = vmatpush.msra.mxu0 %v400
        %685 = vmatpush.msra.mxu0 %v399
        %686 = vmatpush.msra.mxu0 %v398
        %687 = vmatpush.msra.mxu0 %v397
        %688 = vmatpush.msra.mxu0 %v396
        %689 = vmatpush.msra.mxu0 %v395
        %690 = vmatpush.msra.mxu0 %v394
        %691 = vmatpush.msra.mxu0 %v393
        %692 = vmatpush.msra.mxu0 %v392
        %693 = vmatpush.msra.mxu0 %v391
        %694 = vmatpush.msra.mxu0 %v390
        %695 = vmatpush.msra.mxu0 %v389
        %696 = vmatpush.msra.mxu0 %v388
        %697 = vmatpush.msra.mxu0 %v387
        %698 = vmatmul.f32.gmra.mxu0 %v281
        %v699 = vpop.f32.mrf.mxu0
        %v700 = vadd.f32 %v635, %v699
        %701 = vmatmul.f32.gmra.mxu0 %v282
        %v702 = vpop.f32.mrf.mxu0
        %v703 = vadd.f32 %v638, %v702
        %704 = vmatmul.f32.gmra.mxu0 %v283
        %v705 = vpop.f32.mrf.mxu0
        %v706 = vadd.f32 %v641, %v705
        %707 = vmatmul.f32.gmra.mxu0 %v284
        %v708 = vpop.f32.mrf.mxu0
        %v709 = vadd.f32 %v644, %v708
        %710 = vmatmul.f32.gmra.mxu0 %v285
        %v711 = vpop.f32.mrf.mxu0
        %v712 = vadd.f32 %v647, %v711
        %713 = vmatmul.f32.gmra.mxu0 %v286
        %v714 = vpop.f32.mrf.mxu0
        %v715 = vadd.f32 %v650, %v714
        %716 = vmatmul.f32.gmra.mxu0 %v287
        %v717 = vpop.f32.mrf.mxu0
        %v718 = vadd.f32 %v653, %v717
        %719 = vmatmul.f32.gmra.mxu0 %v288
        %v720 = vpop.f32.mrf.mxu0
        %v721 = vadd.f32 %v656, %v720
        %722 = vmatmul.f32.gmra.mxu0 %v289
        %v723 = vpop.f32.mrf.mxu0
        %v724 = vadd.f32 %v659, %v723
        %725 = vmatmul.f32.gmra.mxu0 %v290
        %v726 = vpop.f32.mrf.mxu0
        %v727 = vadd.f32 %v662, %v726
        %728 = vmatmul.f32.gmra.mxu0 %v291
        %v729 = vpop.f32.mrf.mxu0
        %v730 = vadd.f32 %v665, %v729
        %731 = vmatmul.f32.gmra.mxu0 %v292
        %v732 = vpop.f32.mrf.mxu0
        %v733 = vadd.f32 %v668, %v732
        %734 = vmatmul.f32.gmra.mxu0 %v293
        %v735 = vpop.f32.mrf.mxu0
        %v736 = vadd.f32 %v671, %v735
        %737 = vmatmul.f32.gmra.mxu0 %v294
        %v738 = vpop.f32.mrf.mxu0
        %v739 = vadd.f32 %v674, %v738
        %740 = vmatmul.f32.gmra.mxu0 %v295
        %v741 = vpop.f32.mrf.mxu0
        %v742 = vadd.f32 %v677, %v741
        %743 = vmatmul.f32.gmra.mxu0 %v296
        %v744 = vpop.f32.mrf.mxu0
        %v745 = vadd.f32 %v680, %v744
        %746 = vdwg.mxu0
        %747 = vmatpush.msra.mxu0 %v418
        %748 = vmatpush.msra.mxu0 %v417
        %749 = vmatpush.msra.mxu0 %v416
        %750 = vmatpush.msra.mxu0 %v415
        %751 = vmatpush.msra.mxu0 %v414
        %752 = vmatpush.msra.mxu0 %v413
        %753 = vmatpush.msra.mxu0 %v412
        %754 = vmatpush.msra.mxu0 %v411
        %755 = vmatpush.msra.mxu0 %v410
        %756 = vmatpush.msra.mxu0 %v409
        %757 = vmatpush.msra.mxu0 %v408
        %758 = vmatpush.msra.mxu0 %v407
        %759 = vmatpush.msra.mxu0 %v406
        %760 = vmatpush.msra.mxu0 %v405
        %761 = vmatpush.msra.mxu0 %v404
        %762 = vmatpush.msra.mxu0 %v403
        %763 = vmatmul.f32.gmra.mxu0 %v301
        %v764 = vpop.f32.mrf.mxu0
        %v765 = vadd.f32 %v700, %v764
        %766 = vmatmul.f32.gmra.mxu0 %v302
        %v767 = vpop.f32.mrf.mxu0
        %v768 = vadd.f32 %v703, %v767
        %769 = vmatmul.f32.gmra.mxu0 %v303
        %v770 = vpop.f32.mrf.mxu0
        %v771 = vadd.f32 %v706, %v770
        %772 = vmatmul.f32.gmra.mxu0 %v304
        %v773 = vpop.f32.mrf.mxu0
        %v774 = vadd.f32 %v709, %v773
        %775 = vmatmul.f32.gmra.mxu0 %v305
        %v776 = vpop.f32.mrf.mxu0
        %v777 = vadd.f32 %v712, %v776
        %778 = vmatmul.f32.gmra.mxu0 %v306
        %v779 = vpop.f32.mrf.mxu0
        %v780 = vadd.f32 %v715, %v779
        %781 = vmatmul.f32.gmra.mxu0 %v307
        %v782 = vpop.f32.mrf.mxu0
        %v783 = vadd.f32 %v718, %v782
        %784 = vmatmul.f32.gmra.mxu0 %v308
        %v785 = vpop.f32.mrf.mxu0
        %v786 = vadd.f32 %v721, %v785
        %787 = vmatmul.f32.gmra.mxu0 %v309
        %v788 = vpop.f32.mrf.mxu0
        %v789 = vadd.f32 %v724, %v788
        %790 = vmatmul.f32.gmra.mxu0 %v310
        %v791 = vpop.f32.mrf.mxu0
        %v792 = vadd.f32 %v727, %v791
        %793 = vmatmul.f32.gmra.mxu0 %v311
        %v794 = vpop.f32.mrf.mxu0
        %v795 = vadd.f32 %v730, %v794
        %796 = vmatmul.f32.gmra.mxu0 %v312
        %v797 = vpop.f32.mrf.mxu0
        %v798 = vadd.f32 %v733, %v797
        %799 = vmatmul.f32.gmra.mxu0 %v313
        %v800 = vpop.f32.mrf.mxu0
        %v801 = vadd.f32 %v736, %v800
        %802 = vmatmul.f32.gmra.mxu0 %v314
        %v803 = vpop.f32.mrf.mxu0
        %v804 = vadd.f32 %v739, %v803
        %805 = vmatmul.f32.gmra.mxu0 %v315
        %v806 = vpop.f32.mrf.mxu0
        %v807 = vadd.f32 %v742, %v806
        %808 = vmatmul.f32.gmra.mxu0 %v316
        %v809 = vpop.f32.mrf.mxu0
        %v810 = vadd.f32 %v745, %v809
        %811 = vdwg.mxu0
        %812 = vmatpush.msra.mxu0 %v434
        %813 = vmatpush.msra.mxu0 %v433
        %814 = vmatpush.msra.mxu0 %v432
        %815 = vmatpush.msra.mxu0 %v431
        %816 = vmatpush.msra.mxu0 %v430
        %817 = vmatpush.msra.mxu0 %v429
        %818 = vmatpush.msra.mxu0 %v428
        %819 = vmatpush.msra.mxu0 %v427
        %820 = vmatpush.msra.mxu0 %v426
        %821 = vmatpush.msra.mxu0 %v425
        %822 = vmatpush.msra.mxu0 %v424
        %823 = vmatpush.msra.mxu0 %v423
        %824 = vmatpush.msra.mxu0 %v422
        %825 = vmatpush.msra.mxu0 %v421
        %826 = vmatpush.msra.mxu0 %v420
        %827 = vmatpush.msra.mxu0 %v419
        %828 = vmatmul.f32.gmra.mxu0 %v321
        %v829 = vpop.f32.mrf.mxu0
        %v830 = vadd.f32 %v765, %v829
        %831 = vmatmul.f32.gmra.mxu0 %v322
        %v832 = vpop.f32.mrf.mxu0
        %v833 = vadd.f32 %v768, %v832
        %834 = vmatmul.f32.gmra.mxu0 %v323
        %v835 = vpop.f32.mrf.mxu0
        %v836 = vadd.f32 %v771, %v835
        %837 = vmatmul.f32.gmra.mxu0 %v324
        %v838 = vpop.f32.mrf.mxu0
        %v839 = vadd.f32 %v774, %v838
        %840 = vmatmul.f32.gmra.mxu0 %v325
        %v841 = vpop.f32.mrf.mxu0
        %v842 = vadd.f32 %v777, %v841
        %843 = vmatmul.f32.gmra.mxu0 %v326
        %v844 = vpop.f32.mrf.mxu0
        %v845 = vadd.f32 %v780, %v844
        %846 = vmatmul.f32.gmra.mxu0 %v327
        %v847 = vpop.f32.mrf.mxu0
        %v848 = vadd.f32 %v783, %v847
        %849 = vmatmul.f32.gmra.mxu0 %v328
        %v850 = vpop.f32.mrf.mxu0
        %v851 = vadd.f32 %v786, %v850
        %852 = vmatmul.f32.gmra.mxu0 %v329
        %v853 = vpop.f32.mrf.mxu0
        %v854 = vadd.f32 %v789, %v853
        %855 = vmatmul.f32.gmra.mxu0 %v330
        %v856 = vpop.f32.mrf.mxu0
        %v857 = vadd.f32 %v792, %v856
        %858 = vmatmul.f32.gmra.mxu0 %v331
        %v859 = vpop.f32.mrf.mxu0
        %v860 = vadd.f32 %v795, %v859
        %861 = vmatmul.f32.gmra.mxu0 %v332
        %v862 = vpop.f32.mrf.mxu0
        %v863 = vadd.f32 %v798, %v862
        %864 = vmatmul.f32.gmra.mxu0 %v333
        %v865 = vpop.f32.mrf.mxu0
        %v866 = vadd.f32 %v801, %v865
        %867 = vmatmul.f32.gmra.mxu0 %v334
        %v868 = vpop.f32.mrf.mxu0
        %v869 = vadd.f32 %v804, %v868
        %870 = vmatmul.f32.gmra.mxu0 %v335
        %v871 = vpop.f32.mrf.mxu0
        %v872 = vadd.f32 %v807, %v871
        %873 = vmatmul.f32.gmra.mxu0 %v336
        %v874 = vpop.f32.mrf.mxu0
        %v875 = vadd.f32 %v810, %v874
        %876 = vdwg.mxu0
        %877 = vmatpush.msra.mxu0 %v450
        %878 = vmatpush.msra.mxu0 %v449
        %879 = vmatpush.msra.mxu0 %v448
        %880 = vmatpush.msra.mxu0 %v447
        %881 = vmatpush.msra.mxu0 %v446
        %882 = vmatpush.msra.mxu0 %v445
        %883 = vmatpush.msra.mxu0 %v444
        %884 = vmatpush.msra.mxu0 %v443
        %885 = vmatpush.msra.mxu0 %v442
        %886 = vmatpush.msra.mxu0 %v441
        %887 = vmatpush.msra.mxu0 %v440
        %888 = vmatpush.msra.mxu0 %v439
        %889 = vmatpush.msra.mxu0 %v438
        %890 = vmatpush.msra.mxu0 %v437
        %891 = vmatpush.msra.mxu0 %v436
        %892 = vmatpush.msra.mxu0 %v435
        %893 = vmatmul.f32.gmra.mxu0 %v283
        %v894 = vpop.f32.mrf.mxu0
        %v895 = vadd.f32 %v830, %v894
        %896 = vmatmul.f32.gmra.mxu0 %v284
        %v897 = vpop.f32.mrf.mxu0
        %v898 = vadd.f32 %v833, %v897
        %899 = vmatmul.f32.gmra.mxu0 %v285
        %v900 = vpop.f32.mrf.mxu0
        %v901 = vadd.f32 %v836, %v900
        %902 = vmatmul.f32.gmra.mxu0 %v286
        %v903 = vpop.f32.mrf.mxu0
        %v904 = vadd.f32 %v839, %v903
        %905 = vmatmul.f32.gmra.mxu0 %v287
        %v906 = vpop.f32.mrf.mxu0
        %v907 = vadd.f32 %v842, %v906
        %908 = vmatmul.f32.gmra.mxu0 %v288
        %v909 = vpop.f32.mrf.mxu0
        %v910 = vadd.f32 %v845, %v909
        %911 = vmatmul.f32.gmra.mxu0 %v289
        %v912 = vpop.f32.mrf.mxu0
        %v913 = vadd.f32 %v848, %v912
        %914 = vmatmul.f32.gmra.mxu0 %v290
        %v915 = vpop.f32.mrf.mxu0
        %v916 = vadd.f32 %v851, %v915
        %917 = vmatmul.f32.gmra.mxu0 %v291
        %v918 = vpop.f32.mrf.mxu0
        %v919 = vadd.f32 %v854, %v918
        %920 = vmatmul.f32.gmra.mxu0 %v292
        %v921 = vpop.f32.mrf.mxu0
        %v922 = vadd.f32 %v857, %v921
        %923 = vmatmul.f32.gmra.mxu0 %v293
        %v924 = vpop.f32.mrf.mxu0
        %v925 = vadd.f32 %v860, %v924
        %926 = vmatmul.f32.gmra.mxu0 %v294
        %v927 = vpop.f32.mrf.mxu0
        %v928 = vadd.f32 %v863, %v927
        %929 = vmatmul.f32.gmra.mxu0 %v295
        %v930 = vpop.f32.mrf.mxu0
        %v931 = vadd.f32 %v866, %v930
        %932 = vmatmul.f32.gmra.mxu0 %v296
        %v933 = vpop.f32.mrf.mxu0
        %v934 = vadd.f32 %v869, %v933
        %935 = vmatmul.f32.gmra.mxu0 %v297
        %v936 = vpop.f32.mrf.mxu0
        %v937 = vadd.f32 %v872, %v936
        %938 = vmatmul.f32.gmra.mxu0 %v298
        %v939 = vpop.f32.mrf.mxu0
        %v940 = vadd.f32 %v875, %v939
        %941 = vdwg.mxu0
        %942 = vmatpush.msra.mxu0 %v466
        %943 = vmatpush.msra.mxu0 %v465
        %944 = vmatpush.msra.mxu0 %v464
        %945 = vmatpush.msra.mxu0 %v463
        %946 = vmatpush.msra.mxu0 %v462
        %947 = vmatpush.msra.mxu0 %v461
        %948 = vmatpush.msra.mxu0 %v460
        %949 = vmatpush.msra.mxu0 %v459
        %950 = vmatpush.msra.mxu0 %v458
        %951 = vmatpush.msra.mxu0 %v457
        %952 = vmatpush.msra.mxu0 %v456
        %953 = vmatpush.msra.mxu0 %v455
        %954 = vmatpush.msra.mxu0 %v454
        %955 = vmatpush.msra.mxu0 %v453
        %956 = vmatpush.msra.mxu0 %v452
        %957 = vmatpush.msra.mxu0 %v451
        %958 = vmatmul.f32.gmra.mxu0 %v303
        %v959 = vpop.f32.mrf.mxu0
        %v960 = vadd.f32 %v895, %v959
        %961 = vmatmul.f32.gmra.mxu0 %v304
        %v962 = vpop.f32.mrf.mxu0
        %v963 = vadd.f32 %v898, %v962
        %964 = vmatmul.f32.gmra.mxu0 %v305
        %v965 = vpop.f32.mrf.mxu0
        %v966 = vadd.f32 %v901, %v965
        %967 = vmatmul.f32.gmra.mxu0 %v306
        %v968 = vpop.f32.mrf.mxu0
        %v969 = vadd.f32 %v904, %v968
        %970 = vmatmul.f32.gmra.mxu0 %v307
        %v971 = vpop.f32.mrf.mxu0
        %v972 = vadd.f32 %v907, %v971
        %973 = vmatmul.f32.gmra.mxu0 %v308
        %v974 = vpop.f32.mrf.mxu0
        %v975 = vadd.f32 %v910, %v974
        %976 = vmatmul.f32.gmra.mxu0 %v309
        %v977 = vpop.f32.mrf.mxu0
        %v978 = vadd.f32 %v913, %v977
        %979 = vmatmul.f32.gmra.mxu0 %v310
        %v980 = vpop.f32.mrf.mxu0
        %v981 = vadd.f32 %v916, %v980
        %982 = vmatmul.f32.gmra.mxu0 %v311
        %v983 = vpop.f32.mrf.mxu0
        %v984 = vadd.f32 %v919, %v983
        %985 = vmatmul.f32.gmra.mxu0 %v312
        %v986 = vpop.f32.mrf.mxu0
        %v987 = vadd.f32 %v922, %v986
        %988 = vmatmul.f32.gmra.mxu0 %v313
        %v989 = vpop.f32.mrf.mxu0
        %v990 = vadd.f32 %v925, %v989
        %991 = vmatmul.f32.gmra.mxu0 %v314
        %v992 = vpop.f32.mrf.mxu0
        %v993 = vadd.f32 %v928, %v992
        %994 = vmatmul.f32.gmra.mxu0 %v315
        %v995 = vpop.f32.mrf.mxu0
        %v996 = vadd.f32 %v931, %v995
        %997 = vmatmul.f32.gmra.mxu0 %v316
        %v998 = vpop.f32.mrf.mxu0
        %v999 = vadd.f32 %v934, %v998
        %1000 = vmatmul.f32.gmra.mxu0 %v317
        %v1001 = vpop.f32.mrf.mxu0
        %v1002 = vadd.f32 %v937, %v1001
        %1003 = vmatmul.f32.gmra.mxu0 %v318
        %v1004 = vpop.f32.mrf.mxu0
        %v1005 = vadd.f32 %v940, %v1004
        %1006 = vdwg.mxu0
        %1007 = vmatpush.msra.mxu0 %v482
        %1008 = vmatpush.msra.mxu0 %v481
        %1009 = vmatpush.msra.mxu0 %v480
        %1010 = vmatpush.msra.mxu0 %v479
        %1011 = vmatpush.msra.mxu0 %v478
        %1012 = vmatpush.msra.mxu0 %v477
        %1013 = vmatpush.msra.mxu0 %v476
        %1014 = vmatpush.msra.mxu0 %v475
        %1015 = vmatpush.msra.mxu0 %v474
        %1016 = vmatpush.msra.mxu0 %v473
        %1017 = vmatpush.msra.mxu0 %v472
        %1018 = vmatpush.msra.mxu0 %v471
        %1019 = vmatpush.msra.mxu0 %v470
        %1020 = vmatpush.msra.mxu0 %v469
        %1021 = vmatpush.msra.mxu0 %v468
        %1022 = vmatpush.msra.mxu0 %v467
        %1023 = vmatmul.f32.gmra.mxu0 %v323
        %v1024 = vpop.f32.mrf.mxu0
        %v1025 = vadd.f32 %v960, %v1024
        %1026 = vmatmul.f32.gmra.mxu0 %v324
        %v1027 = vpop.f32.mrf.mxu0
        %v1028 = vadd.f32 %v963, %v1027
        %1029 = vmatmul.f32.gmra.mxu0 %v325
        %v1030 = vpop.f32.mrf.mxu0
        %v1031 = vadd.f32 %v966, %v1030
        %1032 = vmatmul.f32.gmra.mxu0 %v326
        %v1033 = vpop.f32.mrf.mxu0
        %v1034 = vadd.f32 %v969, %v1033
        %1035 = vmatmul.f32.gmra.mxu0 %v327
        %v1036 = vpop.f32.mrf.mxu0
        %v1037 = vadd.f32 %v972, %v1036
        %1038 = vmatmul.f32.gmra.mxu0 %v328
        %v1039 = vpop.f32.mrf.mxu0
        %v1040 = vadd.f32 %v975, %v1039
        %1041 = vmatmul.f32.gmra.mxu0 %v329
        %v1042 = vpop.f32.mrf.mxu0
        %v1043 = vadd.f32 %v978, %v1042
        %1044 = vmatmul.f32.gmra.mxu0 %v330
        %v1045 = vpop.f32.mrf.mxu0
        %v1046 = vadd.f32 %v981, %v1045
        %1047 = vmatmul.f32.gmra.mxu0 %v331
        %v1048 = vpop.f32.mrf.mxu0
        %v1049 = vadd.f32 %v984, %v1048
        %1050 = vmatmul.f32.gmra.mxu0 %v332
        %v1051 = vpop.f32.mrf.mxu0
        %v1052 = vadd.f32 %v987, %v1051
        %1053 = vmatmul.f32.gmra.mxu0 %v333
        %v1054 = vpop.f32.mrf.mxu0
        %v1055 = vadd.f32 %v990, %v1054
        %1056 = vmatmul.f32.gmra.mxu0 %v334
        %v1057 = vpop.f32.mrf.mxu0
        %v1058 = vadd.f32 %v993, %v1057
        %1059 = vmatmul.f32.gmra.mxu0 %v335
        %v1060 = vpop.f32.mrf.mxu0
        %v1061 = vadd.f32 %v996, %v1060
        %1062 = vmatmul.f32.gmra.mxu0 %v336
        %v1063 = vpop.f32.mrf.mxu0
        %v1064 = vadd.f32 %v999, %v1063
        %1065 = vmatmul.f32.gmra.mxu0 %v337
        %v1066 = vpop.f32.mrf.mxu0
        %v1067 = vadd.f32 %v1002, %v1066
        %1068 = vmatmul.f32.gmra.mxu0 %v338
        %v1069 = vpop.f32.mrf.mxu0
        %v1070 = vadd.f32 %v1005, %v1069
        %1071 = vdwg.mxu0
        %v1072 = vld [vmem:[%s277] sm:$0x1]
        %v1074 = vperm.slane %v1072, 0
        %v1076 = vmul.f32 %v1025, %v1074
        %v1077 = vmul.f32 %v1028, %v1074
        %v1078 = vmul.f32 %v1031, %v1074
        %v1079 = vmul.f32 %v1034, %v1074
        %v1080 = vmul.f32 %v1037, %v1074
        %v1081 = vmul.f32 %v1040, %v1074
        %v1082 = vmul.f32 %v1043, %v1074
        %v1083 = vmul.f32 %v1046, %v1074
        %v1084 = vmul.f32 %v1049, %v1074
        %v1085 = vmul.f32 %v1052, %v1074
        %v1086 = vmul.f32 %v1055, %v1074
        %v1087 = vmul.f32 %v1058, %v1074
        %v1088 = vmul.f32 %v1061, %v1074
        %v1089 = vmul.f32 %v1064, %v1074
        %v1090 = vmul.f32 %v1067, %v1074
        %v1091 = vmul.f32 %v1070, %v1074
        %1092 = vst [vmem:[%s258] sm:$0xff] %v1076
        %1093 = vst [vmem:[%s258 + $0x8] sm:$0xff] %v1077
        %1094 = vst [vmem:[%s258 + $0x10] sm:$0xff] %v1078
        %1095 = vst [vmem:[%s258 + $0x18] sm:$0xff] %v1079
        %1096 = vst [vmem:[%s258 + $0x20] sm:$0xff] %v1080
        %1097 = vst [vmem:[%s258 + $0x28] sm:$0xff] %v1081
        %1098 = vst [vmem:[%s258 + $0x30] sm:$0xff] %v1082
        %1099 = vst [vmem:[%s258 + $0x38] sm:$0xff] %v1083
        %1100 = vst [vmem:[%s258 + $0x40] sm:$0xff] %v1084
        %1101 = vst [vmem:[%s258 + $0x48] sm:$0xff] %v1085
        %1102 = vst [vmem:[%s258 + $0x50] sm:$0xff] %v1086
        %1103 = vst [vmem:[%s258 + $0x58] sm:$0xff] %v1087
        %1104 = vst [vmem:[%s258 + $0x60] sm:$0xff] %v1088
        %1105 = vst [vmem:[%s258 + $0x68] sm:$0xff] %v1089
        %1106 = vst [vmem:[%s258 + $0x70] sm:$0xff] %v1090
        %1107 = vst [vmem:[%s258 + $0x78] sm:$0xff] %v1091
        %s1108 = sand.u32 %s155, 1
        %s1109 = scalar_lea.sflag [#allocation3], %s1108
        %s1110 = sand.u32 %s155, 1
        %s1111 = smul.addr %s1110, 128
        %s1112 = scalar_lea.vmem [#allocation2], %s1111
        // Predicated region
        $region37: #{tpu_custom_call.1} parent=35 // pred_check
          %p1113 = pneg %p165
        $region38: #{tpu_custom_call.1} parent=35 // pred_check_branch
          %1115 = sbr.rel (%p1113) target = $region40
        $region39: #{tpu_custom_call.1} parent=35 // pred_region
          %s1116 = smul.u32 8, %s24
          %1118 = vsyncadd %s1109, 0
          %s1119 = smul.addr %s1116, 2
          %s1120 = sadd.s32 %s25, %s1119
          %s1121 = smul.addr %s23, 32
          %s1122 = sadd.s32 %s1120, %s1121
          %s1123 = smul.addr %s1122, 8
          %s1124 = scalar_lea.hbm %s4, %s1123
          %s1125 = sshll.u32 %s1112, 4
          %s1126 = int_to_ptr.vmem [resolvable:$true] %s1125
          %s1127 = sshll.u32 %s1124, 4
          %s1128 = int_to_ptr.hbm [resolvable:$true] %s1127
          %1133 = dma.vmem_to_hbm [thread:$0]  %s1126, 2048, %s1128, %s1109, 128, 128, 8
        $region40: #{tpu_custom_call.1} parent=35 // pred_fallthru
          _
      $region36: #{tpu_custom_call.1} parent=5 // pred_fallthru
        _
      %p1134 = scmp.le.s32.totalorder 2, %s13
      // Predicated region
      $region41: #{tpu_custom_call.1} parent=5 // pred_check
        %p1135 = pneg %p1134
      $region42: #{tpu_custom_call.1} parent=5 // pred_check_branch
        %1137 = sbr.rel (%p1135) target = $region44
      $region43: #{tpu_custom_call.1} parent=5 // pred_region
        %s1138 = ssub.s32 %s13, 2
        // Predicated region
        $region45: #{tpu_custom_call.1} parent=43 // pred_check
          %p1139 = pneg %p171
        $region46: #{tpu_custom_call.1} parent=43 // pred_check_branch
          %1141 = sbr.rel (%p1139) target = $region48
        $region47: #{tpu_custom_call.1} parent=43 // pred_region
          %s1142 = sand.u32 %s156, 1
          %s1143 = scalar_lea.sflag [#allocation3], %s1142
          %s1144 = sand.u32 %s156, 1
          %s1145 = smul.addr %s1144, 128
          %s1146 = scalar_lea.vmem [#allocation2], %s1145
          %1148 = dma.done %s1143, 2048
        $region48: #{tpu_custom_call.1} parent=43 // pred_fallthru
          _
      $region44: #{tpu_custom_call.1} parent=5 // pred_fallthru
        _
    $region6: #{tpu_custom_call.1} parent=1 // loop_footer
      %s17 = sadd.s32 1, %s13
    $region7: #{tpu_custom_call.1} parent=1 // loop_footer_branch
      %12 = sbr.rel target = $region3
    $region8: #{tpu_custom_call.1} parent=1 // loop_exit
      _
    %1149 = vsyncpa [#allocation3], 1
    %s1150 = scalar_lea.sflag [#allocation3], 1
    %1151 = vsyncpa %s1150, 1

</llo_original>
